<compile_context>
chip_gen: v5e
topology: v5e:2x2
jax: 0.10.0
libtpu: 0.0.40
codegen_flags: <defaults>
</compile_context>

<pallas_src>
import functools
import math

import jax
import jax.numpy as jnp
from jax import lax
from jax.experimental import pallas as pl
from jax.experimental.pallas import tpu as pltpu


def _sdpa_kernel(q_ref, k_ref, v_ref, o_ref, q_sc, m_sc, l_sc, acc_sc, *, scale):
    # Block shapes: q_ref (1,1,TQ,Dk), k_ref (1,1,TK,Dk), v_ref (1,1,TK,Dv),
    #               o_ref (1,1,TQ,Dv). Scratch persists across the key-tile axis.
    ki = pl.program_id(3)

    @pl.when(ki == 0)
    def _():
        # Fold the softmax scale into Q once per query tile (hoisted out of the
        # key-tile loop) and cast to bf16 so the QK^T matmul runs at MXU bf16 rate.
        q_sc[...] = (q_ref[0, 0].astype(jnp.float32) * scale).astype(jnp.bfloat16)
        m_sc[...] = jnp.full_like(m_sc, -jnp.inf)
        l_sc[...] = jnp.zeros_like(l_sc)
        acc_sc[...] = jnp.zeros_like(acc_sc)

    q = q_sc[...]                                   # (TQ, Dk) bf16, pre-scaled
    k = k_ref[0, 0].astype(jnp.bfloat16)            # (TK, Dk) bf16
    v = v_ref[0, 0].astype(jnp.bfloat16)            # (TK, Dv) bf16

    # scores: contract last axis of q with last axis of k (no explicit k.T),
    # bf16 operands, f32 accumulation on the MXU.
    s = lax.dot_general(
        q, k,
        dimension_numbers=(((1,), (1,)), ((), ())),
        preferred_element_type=jnp.float32,
    )                                               # (TQ, TK) f32

    # Online softmax update — all elementwise math in f32 (v5e-safe).
    m_prev = m_sc[...]
    m_new = jnp.maximum(m_prev, jnp.max(s, axis=-1, keepdims=True))
    alpha = jnp.exp(m_prev - m_new)                 # rescale for previous accumulators
    p = jnp.exp(s - m_new)                          # (TQ, TK) f32

    l_sc[...] = alpha * l_sc[...] + jnp.sum(p, axis=-1, keepdims=True)
    acc_sc[...] = alpha * acc_sc[...] + jnp.dot(
        p.astype(jnp.bfloat16), v, preferred_element_type=jnp.float32)
    m_sc[...] = m_new

    @pl.when(ki == pl.num_programs(3) - 1)
    def _():
        inv_l = pl.reciprocal(l_sc[...], approx=True)   # EUP vrcp, otherwise idle
        o_ref[0, 0] = (acc_sc[...] * inv_l).astype(o_ref.dtype)


def _pick_tile(n, prefs):
    for t in prefs:
        if t <= n and n % t == 0:
            return t
    return n  # small / irregular extent: use the full dim (valid full-extent block)


def scaled_dot_product_attention(Q, K, V, scale, mask=None, *, tq=None, tk=None,
                                 layout="bshd", kv_buffers=None,
                                 vmem_limit_bytes=None):
    """Pallas implementation of ScaledDotProductAttention.forward (eval mode).

    layout="bshd" (default, matches PyTorch):
        Q: (B, Sq, H, Dk), K: (B, Sk, H, Dk), V: (B, Sk, H, Dv) -> out (B, Sq, H, Dv)
    layout="bhsd" (transpose-free fast path for callers that already hold BHSD):
        Q: (B, H, Sq, Dk), K: (B, H, Sk, Dk), V: (B, H, Sk, Dv) -> out (B, H, Sq, Dv)
    """
    assert mask is None  # TODO(synk): mask path not implemented

    if layout == "bshd":
        # Heads next to batch so trailing block dims are (seq, depth). These are
        # the only O(B*S*H*D) HBM passes outside the kernel; use layout="bhsd"
        # upstream to drop them entirely.
        q = jnp.transpose(Q, (0, 2, 1, 3))
        k = jnp.transpose(K, (0, 2, 1, 3))
        v = jnp.transpose(V, (0, 2, 1, 3))
    elif layout == "bhsd":
        q, k, v = Q, K, V
    else:
        raise ValueError(f"unknown layout {layout!r}")

    B, H, Sq, Dk = q.shape
    _, _, Sk, Dv = v.shape

    # Larger default tiles fill the 256x256 MXUs (v6e/v7x) and cut K/V re-streaming;
    # VMEM footprint stays ~3 MiB even at tq=512, tk=256, D=128.
    tq = tq if tq is not None else _pick_tile(Sq, (512, 256, 128))
    tk = tk if tk is not None else _pick_tile(Sk, (256, 512, 128))
    assert Sq % tq == 0 and Sk % tk == 0

    kernel = functools.partial(_sdpa_kernel, scale=float(scale))

    # Optional deeper K/V buffering if a profile shows exposed DMA (off by default).
    kv_kw = {} if kv_buffers is None else {"pipeline_mode": pl.Buffered(kv_buffers)}

    cp_kwargs = dict(
        dimension_semantics=("parallel", "parallel", "parallel", "arbitrary"))
    if vmem_limit_bytes is not None:
        cp_kwargs["vmem_limit_bytes"] = int(vmem_limit_bytes)

    out_bh = pl.pallas_call(
        kernel,
        out_shape=jax.ShapeDtypeStruct((B, H, Sq, Dv), q.dtype),
        grid_spec=pltpu.PrefetchScalarGridSpec(
            num_scalar_prefetch=0,
            grid=(B, H, Sq // tq, Sk // tk),   # reduction (key-tile) axis last
            in_specs=[
                pl.BlockSpec((1, 1, tq, Dk), lambda b, h, qi, ki: (b, h, qi, 0)),
                pl.BlockSpec((1, 1, tk, Dk), lambda b, h, qi, ki: (b, h, ki, 0),
                             **kv_kw),
                pl.BlockSpec((1, 1, tk, Dv), lambda b, h, qi, ki: (b, h, ki, 0),
                             **kv_kw),
            ],
            out_specs=pl.BlockSpec(
                (1, 1, tq, Dv), lambda b, h, qi, ki: (b, h, qi, 0)),
            scratch_shapes=[
                pltpu.VMEM((tq, Dk), jnp.bfloat16),   # scaled Q (hoisted, bf16)
                pltpu.VMEM((tq, 1), jnp.float32),     # running max
                pltpu.VMEM((tq, 1), jnp.float32),     # running denominator
                pltpu.VMEM((tq, Dv), jnp.float32),    # output accumulator
            ],
        ),
        compiler_params=pltpu.CompilerParams(**cp_kwargs),
    )(q, k, v)

    if layout == "bshd":
        # Back to PyTorch layout (O(S*D) transpose only; no O(S^2) attn transpose).
        return jnp.transpose(out_bh, (0, 2, 1, 3))
    return out_bh


def _reference(Q, K, V, scale):
    scores = jnp.einsum("bshd,bthd->bsht", Q, K) * scale
    w = jax.nn.softmax(scores, axis=-1)
    return jnp.einsum("bsht,bthd->bshd", w, V)


def _run_case(key, B, Sq, Sk, H, Dk, Dv, check_bhsd=False, **kw):
    kq, kk, kv = jax.random.split(key, 3)
    Q = jax.random.normal(kq, (B, Sq, H, Dk), dtype=jnp.float32)
    K = jax.random.normal(kk, (B, Sk, H, Dk), dtype=jnp.float32)
    V = jax.random.normal(kv, (B, Sk, H, Dv), dtype=jnp.float32)
    scale = 1.0 / math.sqrt(Dk)

    ref = _reference(Q, K, V, scale)

    out = scaled_dot_product_attention(Q, K, V, scale, **kw)
    out = jax.block_until_ready(out)
    assert out.shape == (B, Sq, H, Dv)
    # bf16 MXU operands + approx reciprocal on the softmax denominator -> looser tol.
    assert jnp.allclose(out, ref, atol=3e-2, rtol=3e-2), float(
        jnp.max(jnp.abs(out - ref)))

    if check_bhsd:
        # Transpose-free fast path: caller supplies / receives (B, H, S, D).
        qb = jnp.transpose(Q, (0, 2, 1, 3))
        kb = jnp.transpose(K, (0, 2, 1, 3))
        vb = jnp.transpose(V, (0, 2, 1, 3))
        out_bh = scaled_dot_product_attention(qb, kb, vb, scale, layout="bhsd")
        out_bh = jax.block_until_ready(out_bh)
        ref_bh = jnp.transpose(ref, (0, 2, 1, 3))
        assert out_bh.shape == (B, H, Sq, Dv)
        assert jnp.allclose(out_bh, ref_bh, atol=3e-2, rtol=3e-2), float(
            jnp.max(jnp.abs(out_bh - ref_bh)))


if __name__ == "__main__":
    root = jax.random.PRNGKey(0)
    k0, k1 = jax.random.split(root)

    # Small shapes consistent with the module (single-tile, full-extent blocks).
    _run_case(k0, B=2, Sq=8, Sk=8, H=4, Dk=32, Dv=32)

    # Multi-key-tile online-softmax path (tq=256, 2 key tiles per head), plus the
    # transpose-free (B,H,S,D) layout with default (larger) tiles.
    _run_case(k1, B=1, Sq=256, Sk=256, H=2, Dk=128, Dv=128,
              tq=256, tk=128, check_bhsd=True)

    print("KERNEL_OK")
</pallas_src>

<mosaic_0001>
module attributes {stable_mosaic.version = 11 : i64} {
  func.func @_sdpa_kernel(%arg0: i32, %arg1: i32, %arg2: i32, %arg3: i32, %arg4: memref<1x1x8x32xf32, #tpu.memory_space<vmem>>, %arg5: memref<1x1x8x32xf32, #tpu.memory_space<vmem>>, %arg6: memref<1x1x8x32xf32, #tpu.memory_space<vmem>>, %arg7: memref<1x1x8x32xf32, #tpu.memory_space<vmem>>, %arg8: memref<8x32xbf16, #tpu.memory_space<vmem>>, %arg9: memref<8x1xf32, #tpu.memory_space<vmem>>, %arg10: memref<8x1xf32, #tpu.memory_space<vmem>>, %arg11: memref<8x32xf32, #tpu.memory_space<vmem>>) attributes {dimension_semantics = [#tpu.dimension_semantics<parallel>, #tpu.dimension_semantics<parallel>, #tpu.dimension_semantics<parallel>, #tpu.dimension_semantics<arbitrary>], iteration_bounds = array<i64: 2, 4, 1, 1>, scalar_prefetch = 0 : i64, scratch_operands = 4 : i64, tpu.core_type = #tpu.core_type<tc>, window_params = [{transform_indices = @transform_0, window_bounds = array<i64: 1, 1, 8, 32>}, {transform_indices = @transform_1, window_bounds = array<i64: 1, 1, 8, 32>}, {transform_indices = @transform_2, window_bounds = array<i64: 1, 1, 8, 32>}, {transform_indices = @transform_3, window_bounds = array<i64: 1, 1, 8, 32>}]} {
    %c0_i32 = arith.constant 0 : i32
    %0 = arith.cmpi eq, %arg3, %c0_i32 : i32
    %1 = arith.extui %0 : i1 to i32
    %c0_i32_0 = arith.constant 0 : i32
    %2 = arith.cmpi ne, %1, %c0_i32_0 : i32
    scf.if %2 {
      %c0_27 = arith.constant 0 : index
      %c0_28 = arith.constant 0 : index
      %c0_29 = arith.constant 0 : index
      %c0_30 = arith.constant 0 : index
      %37 = vector.load %arg4[%c0_27, %c0_28, %c0_29, %c0_30] : memref<1x1x8x32xf32, #tpu.memory_space<vmem>>, vector<1x1x8x32xf32>
      %38 = vector.shape_cast %37 : vector<1x1x8x32xf32> to vector<8x32xf32>
      %cst_31 = arith.constant 0.176776692 : f32
      %39 = vector.broadcast %cst_31 : f32 to vector<8x32xf32>
      %40 = arith.mulf %38, %39 : vector<8x32xf32>
      %41 = arith.truncf %40 : vector<8x32xf32> to vector<8x32xbf16>
      %c0_32 = arith.constant 0 : index
      %c0_33 = arith.constant 0 : index
      %42 = vector.load %arg8[%c0_32, %c0_33] : memref<8x32xbf16, #tpu.memory_space<vmem>>, vector<8x32xbf16>
      tpu.vector_store %arg8[%c0_32, %c0_33], %41 {strides = array<i32>} : memref<8x32xbf16, #tpu.memory_space<vmem>>, vector<8x32xbf16>,
      %cst_34 = arith.constant 0xFF800000 : f32
      %43 = vector.broadcast %cst_34 : f32 to vector<8x1xf32>
      %c0_35 = arith.constant 0 : index
      %c0_36 = arith.constant 0 : index
      %44 = vector.load %arg9[%c0_35, %c0_36] : memref<8x1xf32, #tpu.memory_space<vmem>>, vector<8x1xf32>
      tpu.vector_store %arg9[%c0_35, %c0_36], %43 {strides = array<i32>} : memref<8x1xf32, #tpu.memory_space<vmem>>, vector<8x1xf32>,
      %cst_37 = arith.constant 0.000000e+00 : f32
      %45 = vector.broadcast %cst_37 : f32 to vector<8x1xf32>
      %c0_38 = arith.constant 0 : index
      %c0_39 = arith.constant 0 : index
      %46 = vector.load %arg10[%c0_38, %c0_39] : memref<8x1xf32, #tpu.memory_space<vmem>>, vector<8x1xf32>
      tpu.vector_store %arg10[%c0_38, %c0_39], %45 {strides = array<i32>} : memref<8x1xf32, #tpu.memory_space<vmem>>, vector<8x1xf32>,
      %cst_40 = arith.constant 0.000000e+00 : f32
      %47 = vector.broadcast %cst_40 : f32 to vector<8x32xf32>
      %c0_41 = arith.constant 0 : index
      %c0_42 = arith.constant 0 : index
      %48 = vector.load %arg11[%c0_41, %c0_42] : memref<8x32xf32, #tpu.memory_space<vmem>>, vector<8x32xf32>
      tpu.vector_store %arg11[%c0_41, %c0_42], %47 {strides = array<i32>} : memref<8x32xf32, #tpu.memory_space<vmem>>, vector<8x32xf32>,
    } else {
    }
    %c0 = arith.constant 0 : index
    %c0_1 = arith.constant 0 : index
    %3 = vector.load %arg8[%c0, %c0_1] : memref<8x32xbf16, #tpu.memory_space<vmem>>, vector<8x32xbf16>
    %c0_2 = arith.constant 0 : index
    %c0_3 = arith.constant 0 : index
    %c0_4 = arith.constant 0 : index
    %c0_5 = arith.constant 0 : index
    %4 = vector.load %arg5[%c0_2, %c0_3, %c0_4, %c0_5] : memref<1x1x8x32xf32, #tpu.memory_space<vmem>>, vector<1x1x8x32xf32>
    %5 = vector.shape_cast %4 : vector<1x1x8x32xf32> to vector<8x32xf32>
    %6 = arith.truncf %5 : vector<8x32xf32> to vector<8x32xbf16>
    %c0_6 = arith.constant 0 : index
    %c0_7 = arith.constant 0 : index
    %c0_8 = arith.constant 0 : index
    %c0_9 = arith.constant 0 : index
    %7 = vector.load %arg6[%c0_6, %c0_7, %c0_8, %c0_9] : memref<1x1x8x32xf32, #tpu.memory_space<vmem>>, vector<1x1x8x32xf32>
    %8 = vector.shape_cast %7 : vector<1x1x8x32xf32> to vector<8x32xf32>
    %9 = arith.truncf %8 : vector<8x32xf32> to vector<8x32xbf16>
    %cst = arith.constant dense<0.000000e+00> : vector<8x8xf32>
    %10 = tpu.matmul %3, %6, %cst {dimension_numbers = #tpu.dot_dimension_numbers<[1], [1], [0], [0], [0, 0, 1, 0], [], []>} : vector<8x32xbf16>, vector<8x32xbf16>, vector<8x8xf32> -> vector<8x8xf32>
    %c0_10 = arith.constant 0 : index
    %c0_11 = arith.constant 0 : index
    %11 = vector.load %arg9[%c0_10, %c0_11] : memref<8x1xf32, #tpu.memory_space<vmem>>, vector<8x1xf32>
    %cst_12 = arith.constant dense<0xFF800000> : vector<8xf32>
    %12 = vector.multi_reduction <maximumf>, %10, %cst_12 [1] : vector<8x8xf32> to vector<8xf32>
    %13 = vector.shape_cast %12 : vector<8xf32> to vector<8x1xf32>
    %14 = arith.maximumf %11, %13 : vector<8x1xf32>
    %15 = arith.subf %11, %14 : vector<8x1xf32>
    %16 = math.exp %15 : vector<8x1xf32>
    %17 = vector.broadcast %14 : vector<8x1xf32> to vector<8x8xf32>
    %18 = arith.subf %10, %17 : vector<8x8xf32>
    %19 = math.exp %18 : vector<8x8xf32>
    %c0_13 = arith.constant 0 : index
    %c0_14 = arith.constant 0 : index
    %20 = vector.load %arg10[%c0_13, %c0_14] : memref<8x1xf32, #tpu.memory_space<vmem>>, vector<8x1xf32>
    %21 = arith.mulf %16, %20 : vector<8x1xf32>
    %cst_15 = arith.constant dense<0.000000e+00> : vector<8xf32>
    %22 = vector.multi_reduction <add>, %19, %cst_15 [1] : vector<8x8xf32> to vector<8xf32>
    %23 = vector.shape_cast %22 : vector<8xf32> to vector<8x1xf32>
    %24 = arith.addf %21, %23 : vector<8x1xf32>
    %c0_16 = arith.constant 0 : index
    %c0_17 = arith.constant 0 : index
    %25 = vector.load %arg10[%c0_16, %c0_17] : memref<8x1xf32, #tpu.memory_space<vmem>>, vector<8x1xf32>
    tpu.vector_store %arg10[%c0_16, %c0_17], %24 {strides = array<i32>} : memref<8x1xf32, #tpu.memory_space<vmem>>, vector<8x1xf32>,
    %c0_18 = arith.constant 0 : index
    %c0_19 = arith.constant 0 : index
    %26 = vector.load %arg11[%c0_18, %c0_19] : memref<8x32xf32, #tpu.memory_space<vmem>>, vector<8x32xf32>
    %27 = vector.broadcast %16 : vector<8x1xf32> to vector<8x32xf32>
    %28 = arith.mulf %27, %26 : vector<8x32xf32>
    %29 = arith.truncf %19 : vector<8x8xf32> to vector<8x8xbf16>
    %cst_20 = arith.constant dense<0.000000e+00> : vector<8x32xf32>
    %30 = tpu.matmul %29, %9, %cst_20 {dimension_numbers = #tpu.dot_dimension_numbers<[1], [0], [0], [1], [0, 0, 1, 1], [], []>} : vector<8x8xbf16>, vector<8x32xbf16>, vector<8x32xf32> -> vector<8x32xf32>
    %31 = arith.addf %28, %30 : vector<8x32xf32>
    %c0_21 = arith.constant 0 : index
    %c0_22 = arith.constant 0 : index
    %32 = vector.load %arg11[%c0_21, %c0_22] : memref<8x32xf32, #tpu.memory_space<vmem>>, vector<8x32xf32>
    tpu.vector_store %arg11[%c0_21, %c0_22], %31 {strides = array<i32>} : memref<8x32xf32, #tpu.memory_space<vmem>>, vector<8x32xf32>,
    %c0_23 = arith.constant 0 : index
    %c0_24 = arith.constant 0 : index
    %33 = vector.load %arg9[%c0_23, %c0_24] : memref<8x1xf32, #tpu.memory_space<vmem>>, vector<8x1xf32>
    tpu.vector_store %arg9[%c0_23, %c0_24], %14 {strides = array<i32>} : memref<8x1xf32, #tpu.memory_space<vmem>>, vector<8x1xf32>,
    %c0_i32_25 = arith.constant 0 : i32
    %34 = arith.cmpi eq, %arg3, %c0_i32_25 : i32
    %35 = arith.extui %34 : i1 to i32
    %c0_i32_26 = arith.constant 0 : i32
    %36 = arith.cmpi ne, %35, %c0_i32_26 : i32
    scf.if %36 {
      %c0_27 = arith.constant 0 : index
      %c0_28 = arith.constant 0 : index
      %37 = vector.load %arg10[%c0_27, %c0_28] : memref<8x1xf32, #tpu.memory_space<vmem>>, vector<8x1xf32>
      %38 = tpu.reciprocal %37 {approx = true} : vector<8x1xf32> -> vector<8x1xf32>
      %c0_29 = arith.constant 0 : index
      %c0_30 = arith.constant 0 : index
      %39 = vector.load %arg11[%c0_29, %c0_30] : memref<8x32xf32, #tpu.memory_space<vmem>>, vector<8x32xf32>
      %40 = vector.broadcast %38 : vector<8x1xf32> to vector<8x32xf32>
      %41 = arith.mulf %39, %40 : vector<8x32xf32>
      %c0_31 = arith.constant 0 : index
      %c0_32 = arith.constant 0 : index
      %c0_33 = arith.constant 0 : index
      %c0_34 = arith.constant 0 : index
      %42 = vector.load %arg7[%c0_31, %c0_32, %c0_33, %c0_34] : memref<1x1x8x32xf32, #tpu.memory_space<vmem>>, vector<1x1x8x32xf32>
      %43 = vector.shape_cast %42 : vector<1x1x8x32xf32> to vector<8x32xf32>
      %44 = vector.shape_cast %41 : vector<8x32xf32> to vector<1x1x8x32xf32>
      tpu.vector_store %arg7[%c0_31, %c0_32, %c0_33, %c0_34], %44 {strides = array<i32>} : memref<1x1x8x32xf32, #tpu.memory_space<vmem>>, vector<1x1x8x32xf32>,
    } else {
    }
    return
  }
  func.func @transform_0(%arg0: i32, %arg1: i32, %arg2: i32, %arg3: i32) -> (i32, i32, i32, i32) {
    %c0_i32 = arith.constant 0 : i32
    %c0_i32_0 = arith.constant 0 : i32
    return %arg0, %arg1, %arg2, %c0_i32 : i32, i32, i32, i32
  }
  func.func @transform_1(%arg0: i32, %arg1: i32, %arg2: i32, %arg3: i32) -> (i32, i32, i32, i32) {
    %c0_i32 = arith.constant 0 : i32
    %c0_i32_0 = arith.constant 0 : i32
    return %arg0, %arg1, %arg3, %c0_i32 : i32, i32, i32, i32
  }
  func.func @transform_2(%arg0: i32, %arg1: i32, %arg2: i32, %arg3: i32) -> (i32, i32, i32, i32) {
    %c0_i32 = arith.constant 0 : i32
    %c0_i32_0 = arith.constant 0 : i32
    return %arg0, %arg1, %arg3, %c0_i32 : i32, i32, i32, i32
  }
  func.func @transform_3(%arg0: i32, %arg1: i32, %arg2: i32, %arg3: i32) -> (i32, i32, i32, i32) {
    %c0_i32 = arith.constant 0 : i32
    %c0_i32_0 = arith.constant 0 : i32
    return %arg0, %arg1, %arg2, %c0_i32 : i32, i32, i32, i32
  }
}

</mosaic_0001>

<llo_original>
// kernel: tpu_custom_call.1
$region0: #{tpu_custom_call.1}
  #allocation0 [shape = 'u32[]', space=smem, size = 0x4, offset = 0x4, fixed_abs, tag = 'smem constant byte address 0x4 - core index']
  #allocation1 [shape = 'u32[72,128]{1,0:T(1,128)}', space=vmem, size = 0x9000, scoped, tag = 'internal scratch']
  #allocation2 [shape = 'bf16[8,32]{1,0:T(8,128)(2,1)}', space=vmem, size = 0x800, scoped, tag = 'scratch operand']
  #allocation3 [shape = 'f32[8,1]{1,0:T(8,128)}', space=vmem, size = 0x1000, scoped, tag = 'scratch operand']
  #allocation4 [shape = 'f32[8,1]{1,0:T(8,128)}', space=vmem, size = 0x1000, scoped, tag = 'scratch operand']
  #allocation5 [shape = 'f32[8,32]{1,0:T(8,128)}', space=vmem, size = 0x1000, scoped, tag = 'scratch operand']
  %s0 = inlined_call_operand.hbm [shape: f32[2,4,8,32], index: 0, kind: input, shape index: {}]
  %s1 = inlined_call_operand.hbm [shape: f32[2,4,8,32], index: 1, kind: input, shape index: {}]
  %s2 = inlined_call_operand.hbm [shape: f32[2,4,8,32], index: 2, kind: input, shape index: {}]
  %s3 = inlined_call_operand.hbm [shape: f32[2,4,8,32], index: 3, kind: output, shape index: {}]
  %s4 = sld [smem:[#allocation0]]
  $region65: #{tpu_custom_call.1} parent=0
    _
  %s6 = ssub.s32 1, %s4
  %s7 = scalar_select 0, %s6, %s4
  $region1: #{tpu_custom_call.1} parent=0
    #allocation6 [shape = 'u8[8192]{0}', space=vmem, size = 0x2000, scoped, tag = 'input window, operand 0']
    #allocation7 [shape = 's32[2]{0}', space=sflag, size = 0x8, scoped, tag = 'scoped memory for tpu_custom_call.1']
    #allocation8 [shape = 's32[2]{0}', space=sflag, size = 0x8, scoped, tag = 'scoped memory for tpu_custom_call.1']
    #allocation9 [shape = 'u8[8192]{0}', space=vmem, size = 0x2000, scoped, tag = 'input window, operand 1']
    #allocation10 [shape = 's32[2]{0}', space=sflag, size = 0x8, scoped, tag = 'scoped memory for tpu_custom_call.1']
    #allocation11 [shape = 'u8[8192]{0}', space=vmem, size = 0x2000, scoped, tag = 'input window, operand 2']
    #allocation12 [shape = 'u8[8192]{0}', space=vmem, size = 0x2000, scoped, tag = 'output window, operand 0']
    %8 = vsyncpa [#allocation7], 0
    %s9 = scalar_lea.sflag [#allocation7], 1
    %10 = vsyncpa %s9, 0
    %11 = vsyncpa [#allocation10], 0
    %s12 = scalar_lea.sflag [#allocation10], 1
    %13 = vsyncpa %s12, 0
    %14 = vsyncpa [#allocation8], 0
    %s15 = scalar_lea.sflag [#allocation8], 1
    %16 = vsyncpa %s15, 0
    loop: start=0, step=1, limit=10
    $region2: #{tpu_custom_call.1} parent=1 // loop_pre_header
      _
    $region3: #{tpu_custom_call.1} parent=1 // loop_header
      %s18 = sphi 0, %s22
      %p19 = scmp.ge.s32.totalorder %s18, 10
      %s25 = sphi 0, %s51
      %s26 = sphi 0, %s47
      %s27 = sphi 0, %s43
      %s28 = sphi 0, %s39
      %s29 = sphi 0, %s25
      %s30 = sphi 0, %s26
      %s31 = sphi 0, %s27
      %s32 = sphi 0, %s28
      %s33 = sphi 0, %s29
      %s34 = sphi 0, %s30
      %s35 = sphi 0, %s31
      %s36 = sphi 0, %s32
      %s58 = sphi 0, %s60
      %s61 = sphi 0, %s58
      %s62 = sphi 0, %s61
      %s78 = sphi 0, %s62
      %s88 = sphi 0, %s90
      %s91 = sphi 0, %s88
      %s92 = sphi 0, %s91
      %s108 = sphi 0, %s92
      %s118 = sphi 0, %s120
      %s121 = sphi 0, %s118
      %s122 = sphi 0, %s121
      %s138 = sphi 0, %s122
      %s148 = sphi 0, %s150
      %s151 = sphi 0, %s148
      %s152 = sphi 0, %s151
      %s168 = sphi 0, %s152
    $region4: #{tpu_custom_call.1} parent=1 // loop_header_branch
      %21 = sbr.rel (%p19) target = $region8
    $region5: #{tpu_custom_call.1} parent=1 // loop_body
      %s23 = ssub.s32 %s18, 1
      %s24 = ssub.s32 %s18, 2
      %s37 = sadd.s32 1, %s28
      %p38 = scmp.ge.s32.totalorder %s37, 1
      %s39 = scalar_select %p38, 0, %s37
      %s40 = sadd.s32 1, %s27
      %s41 = scalar_select %p38, %s40, %s27
      %p42 = scmp.ge.s32.totalorder %s41, 1
      %s43 = scalar_select %p42, 0, %s41
      %s44 = sadd.s32 1, %s26
      %s45 = scalar_select %p42, %s44, %s26
      %p46 = scmp.ge.s32.totalorder %s45, 4
      %s47 = scalar_select %p46, 0, %s45
      %s48 = sadd.s32 1, %s25
      %s49 = scalar_select %p46, %s48, %s25
      %p50 = scmp.ge.s32.totalorder %s49, 2
      %s51 = scalar_select %p50, 0, %s49
      %s52 = ssub.s32 %s25, %s51
      %s53 = ssub.s32 %s26, %s47
      %s54 = sor.u32 %s52, %s53
      %s55 = ssub.s32 %s27, %s43
      %s56 = sor.u32 %s54, %s55
      %p57 = scmp.eq.s32.totalorder %s56, 0
      %s59 = sadd.s32 %s58, 1
      %s60 = scalar_select %p57, %s58, %s59
      %p63 = pneg %p57
      %p64 = scmp.eq.s32.totalorder %s18, 7
      %p65 = por %p63, %p64
      %p66 = scmp.ne.s32.totalorder %s58, %s61
      %p67 = scmp.eq.s32.totalorder %s18, 0
      %p68 = por %p66, %p67
      %p69 = scmp.ne.s32.totalorder %s58, %s61
      %p70 = scmp.eq.s32.totalorder %s23, 7
      %p71 = por %p69, %p70
      %p72 = scmp.ne.s32.totalorder %s61, %s62
      %p73 = scmp.eq.s32.totalorder %s23, 0
      %p74 = por %p72, %p73
      %p75 = scmp.ne.s32.totalorder %s61, %s62
      %p76 = scmp.eq.s32.totalorder %s24, 7
      %p77 = por %p75, %p76
      %p79 = scmp.ne.s32.totalorder %s62, %s78
      %p80 = scmp.eq.s32.totalorder %s24, 0
      %p81 = por %p79, %p80
      %s82 = ssub.s32 %s25, %s51
      %s83 = ssub.s32 %s26, %s47
      %s84 = sor.u32 %s82, %s83
      %s85 = ssub.s32 %s28, %s39
      %s86 = sor.u32 %s84, %s85
      %p87 = scmp.eq.s32.totalorder %s86, 0
      %s89 = sadd.s32 %s88, 1
      %s90 = scalar_select %p87, %s88, %s89
      %p93 = pneg %p87
      %p94 = scmp.eq.s32.totalorder %s18, 7
      %p95 = por %p93, %p94
      %p96 = scmp.ne.s32.totalorder %s88, %s91
      %p97 = scmp.eq.s32.totalorder %s18, 0
      %p98 = por %p96, %p97
      %p99 = scmp.ne.s32.totalorder %s88, %s91
      %p100 = scmp.eq.s32.totalorder %s23, 7
      %p101 = por %p99, %p100
      %p102 = scmp.ne.s32.totalorder %s91, %s92
      %p103 = scmp.eq.s32.totalorder %s23, 0
      %p104 = por %p102, %p103
      %p105 = scmp.ne.s32.totalorder %s91, %s92
      %p106 = scmp.eq.s32.totalorder %s24, 7
      %p107 = por %p105, %p106
      %p109 = scmp.ne.s32.totalorder %s92, %s108
      %p110 = scmp.eq.s32.totalorder %s24, 0
      %p111 = por %p109, %p110
      %s112 = ssub.s32 %s25, %s51
      %s113 = ssub.s32 %s26, %s47
      %s114 = sor.u32 %s112, %s113
      %s115 = ssub.s32 %s28, %s39
      %s116 = sor.u32 %s114, %s115
      %p117 = scmp.eq.s32.totalorder %s116, 0
      %s119 = sadd.s32 %s118, 1
      %s120 = scalar_select %p117, %s118, %s119
      %p123 = pneg %p117
      %p124 = scmp.eq.s32.totalorder %s18, 7
      %p125 = por %p123, %p124
      %p126 = scmp.ne.s32.totalorder %s118, %s121
      %p127 = scmp.eq.s32.totalorder %s18, 0
      %p128 = por %p126, %p127
      %p129 = scmp.ne.s32.totalorder %s118, %s121
      %p130 = scmp.eq.s32.totalorder %s23, 7
      %p131 = por %p129, %p130
      %p132 = scmp.ne.s32.totalorder %s121, %s122
      %p133 = scmp.eq.s32.totalorder %s23, 0
      %p134 = por %p132, %p133
      %p135 = scmp.ne.s32.totalorder %s121, %s122
      %p136 = scmp.eq.s32.totalorder %s24, 7
      %p137 = por %p135, %p136
      %p139 = scmp.ne.s32.totalorder %s122, %s138
      %p140 = scmp.eq.s32.totalorder %s24, 0
      %p141 = por %p139, %p140
      %s142 = ssub.s32 %s25, %s51
      %s143 = ssub.s32 %s26, %s47
      %s144 = sor.u32 %s142, %s143
      %s145 = ssub.s32 %s27, %s43
      %s146 = sor.u32 %s144, %s145
      %p147 = scmp.eq.s32.totalorder %s146, 0
      %s149 = sadd.s32 %s148, 1
      %s150 = scalar_select %p147, %s148, %s149
      %p153 = pneg %p147
      %p154 = scmp.eq.s32.totalorder %s18, 7
      %p155 = por %p153, %p154
      %p156 = scmp.ne.s32.totalorder %s148, %s151
      %p157 = scmp.eq.s32.totalorder %s18, 0
      %p158 = por %p156, %p157
      %p159 = scmp.ne.s32.totalorder %s148, %s151
      %p160 = scmp.eq.s32.totalorder %s23, 7
      %p161 = por %p159, %p160
      %p162 = scmp.ne.s32.totalorder %s151, %s152
      %p163 = scmp.eq.s32.totalorder %s23, 0
      %p164 = por %p162, %p163
      %p165 = scmp.ne.s32.totalorder %s151, %s152
      %p166 = scmp.eq.s32.totalorder %s24, 7
      %p167 = por %p165, %p166
      %p169 = scmp.ne.s32.totalorder %s152, %s168
      %p170 = scmp.eq.s32.totalorder %s24, 0
      %p171 = por %p169, %p170
      %p172 = scmp.le.s32.totalorder 1, %s18
      %p173 = scmp.lt.s32.totalorder %s18, 9
      %p174 = pnand %p172, %p173
      %p175 = pneg %p174
      // Predicated region
      $region9: #{tpu_custom_call.1} parent=5 // pred_check
        _
      $region10: #{tpu_custom_call.1} parent=5 // pred_check_branch
        %177 = sbr.rel (%p174) target = $region12
      $region11: #{tpu_custom_call.1} parent=5 // pred_region
        %s178 = ssub.s32 %s18, 1
      $region12: #{tpu_custom_call.1} parent=5 // pred_fallthru
        _
      %p179 = scmp.lt.s32.totalorder %s18, 8
      // Predicated region
      $region13: #{tpu_custom_call.1} parent=5 // pred_check
        %p180 = pneg %p179
      $region14: #{tpu_custom_call.1} parent=5 // pred_check_branch
        %182 = sbr.rel (%p180) target = $region16
      $region15: #{tpu_custom_call.1} parent=5 // pred_region
        // Predicated region
        $region17: #{tpu_custom_call.1} parent=15 // pred_check
          %p183 = pneg %p68
        $region18: #{tpu_custom_call.1} parent=15 // pred_check_branch
          %185 = sbr.rel (%p183) target = $region20
        $region19: #{tpu_custom_call.1} parent=15 // pred_region
          %s186 = sand.u32 %s58, 1
          %s187 = scalar_lea.sflag [#allocation7], %s186
          %s188 = sand.u32 %s58, 1
          %s189 = smul.addr %s188, 8
          %s190 = scalar_lea.vmem [#allocation6], %s189
          %192 = vsyncadd %s187, 0
          %s193 = sadd.s32 %s27, %s26
          %s194 = smul.addr %s25, 4
          %s195 = sadd.s32 %s193, %s194
          %s196 = smul.addr %s195, 8
          %s197 = scalar_lea.hbm %s0, %s196
          %s199 = sshll.u32 %s197, 4
          %s200 = int_to_ptr.hbm [resolvable:$true] %s199
          %s201 = sshll.u32 %s190, 4
          %s202 = int_to_ptr.vmem [resolvable:$true] %s201
          %204 = dma.hbm_to_vmem [thread:$0]  %s200, 128, %s202, %s187
        $region20: #{tpu_custom_call.1} parent=15 // pred_fallthru
          _
        // Predicated region
        $region21: #{tpu_custom_call.1} parent=15 // pred_check
          %p205 = pneg %p98
        $region22: #{tpu_custom_call.1} parent=15 // pred_check_branch
          %207 = sbr.rel (%p205) target = $region24
        $region23: #{tpu_custom_call.1} parent=15 // pred_region
          %s208 = sand.u32 %s18, 1
          %s209 = scalar_lea.sflag [#allocation10], %s208
          %s210 = sand.u32 %s88, 1
          %s211 = smul.addr %s210, 8
          %s212 = scalar_lea.vmem [#allocation9], %s211
          %214 = vsyncadd %s209, 0
          %s215 = sadd.s32 %s28, %s26
          %s216 = smul.addr %s25, 4
          %s217 = sadd.s32 %s215, %s216
          %s218 = smul.addr %s217, 8
          %s219 = scalar_lea.hbm %s1, %s218
          %s221 = sshll.u32 %s219, 4
          %s222 = int_to_ptr.hbm [resolvable:$true] %s221
          %s223 = sshll.u32 %s212, 4
          %s224 = int_to_ptr.vmem [resolvable:$true] %s223
          %226 = dma.hbm_to_vmem [thread:$0]  %s222, 128, %s224, %s209
        $region24: #{tpu_custom_call.1} parent=15 // pred_fallthru
          _
        // Predicated region
        $region25: #{tpu_custom_call.1} parent=15 // pred_check
          %p227 = pneg %p128
        $region26: #{tpu_custom_call.1} parent=15 // pred_check_branch
          %229 = sbr.rel (%p227) target = $region28
        $region27: #{tpu_custom_call.1} parent=15 // pred_region
          %s230 = sand.u32 %s18, 1
          %s231 = scalar_lea.sflag [#allocation10], %s230
          %s232 = sand.u32 %s118, 1
          %s233 = smul.addr %s232, 8
          %s234 = scalar_lea.vmem [#allocation11], %s233
          %236 = vsyncadd %s231, 0
          %s237 = sadd.s32 %s28, %s26
          %s238 = smul.addr %s25, 4
          %s239 = sadd.s32 %s237, %s238
          %s240 = smul.addr %s239, 8
          %s241 = scalar_lea.hbm %s2, %s240
          %s243 = sshll.u32 %s241, 4
          %s244 = int_to_ptr.hbm [resolvable:$true] %s243
          %s245 = sshll.u32 %s234, 4
          %s246 = int_to_ptr.vmem [resolvable:$true] %s245
          %248 = dma.hbm_to_vmem [thread:$0]  %s244, 128, %s246, %s231
        $region28: #{tpu_custom_call.1} parent=15 // pred_fallthru
          _
      $region16: #{tpu_custom_call.1} parent=5 // pred_fallthru
        _
      %p249 = scmp.le.s32.totalorder 1, %s18
      %p250 = scmp.lt.s32.totalorder %s18, 9
      %p251 = pnand %p249, %p250
      %p252 = pneg %p251
      // Predicated region
      $region29: #{tpu_custom_call.1} parent=5 // pred_check
        _
      $region30: #{tpu_custom_call.1} parent=5 // pred_check_branch
        %254 = sbr.rel (%p251) target = $region32
      $region31: #{tpu_custom_call.1} parent=5 // pred_region
        %s255 = ssub.s32 %s18, 1
        %s256 = sand.u32 %s61, 1
        %s257 = scalar_lea.sflag [#allocation7], %s256
        %s258 = sand.u32 %s61, 1
        %s259 = smul.addr %s258, 8
        %s260 = scalar_lea.vmem [#allocation6], %s259
        // Predicated region
        $region33: #{tpu_custom_call.1} parent=31 // pred_check
          %p261 = pneg %p74
        $region34: #{tpu_custom_call.1} parent=31 // pred_check_branch
          %263 = sbr.rel (%p261) target = $region36
        $region35: #{tpu_custom_call.1} parent=31 // pred_region
          %265 = dma.done %s257, 128
        $region36: #{tpu_custom_call.1} parent=31 // pred_fallthru
          _
        %s266 = sand.u32 %s23, 1
        %s267 = scalar_lea.sflag [#allocation10], %s266
        %s268 = sand.u32 %s91, 1
        %s269 = smul.addr %s268, 8
        %s270 = scalar_lea.vmem [#allocation9], %s269
        // Predicated region
        $region37: #{tpu_custom_call.1} parent=31 // pred_check
          %p271 = pneg %p104
        $region38: #{tpu_custom_call.1} parent=31 // pred_check_branch
          %273 = sbr.rel (%p271) target = $region40
        $region39: #{tpu_custom_call.1} parent=31 // pred_region
          %275 = dma.done %s267, 128
        $region40: #{tpu_custom_call.1} parent=31 // pred_fallthru
          _
        %s276 = sand.u32 %s23, 1
        %s277 = scalar_lea.sflag [#allocation10], %s276
        %s278 = sand.u32 %s121, 1
        %s279 = smul.addr %s278, 8
        %s280 = scalar_lea.vmem [#allocation11], %s279
        // Predicated region
        $region41: #{tpu_custom_call.1} parent=31 // pred_check
          %p281 = pneg %p134
        $region42: #{tpu_custom_call.1} parent=31 // pred_check_branch
          %283 = sbr.rel (%p281) target = $region44
        $region43: #{tpu_custom_call.1} parent=31 // pred_region
          %285 = dma.done %s277, 128
        $region44: #{tpu_custom_call.1} parent=31 // pred_fallthru
          _
        %s286 = sand.u32 %s61, 1
        %s287 = scalar_lea.sflag [#allocation7], %s286
        %s288 = sand.u32 %s61, 1
        %s289 = smul.addr %s288, 8
        %s290 = scalar_lea.vmem [#allocation6], %s289
        %p291 = pneg %p74
        %p292 = pneg %p71
        %s293 = sand.u32 %s23, 1
        %s294 = scalar_lea.sflag [#allocation10], %s293
        %s295 = sand.u32 %s91, 1
        %s296 = smul.addr %s295, 8
        %s297 = scalar_lea.vmem [#allocation9], %s296
        %p298 = pneg %p104
        %p299 = pneg %p101
        %s300 = sand.u32 %s23, 1
        %s301 = scalar_lea.sflag [#allocation10], %s300
        %s302 = sand.u32 %s121, 1
        %s303 = smul.addr %s302, 8
        %s304 = scalar_lea.vmem [#allocation11], %s303
        %p305 = pneg %p134
        %p306 = pneg %p131
        %p307 = pneg %p164
        %p308 = pneg %p161
        %s309 = sand.u32 %s151, 1
        %s310 = scalar_lea.sflag [#allocation8], %s309
        %s311 = sand.u32 %s151, 1
        %s312 = smul.addr %s311, 8
        %s313 = scalar_lea.vmem [#allocation12], %s312
        %p315 = scmp.eq.s32.totalorder %s32, 0
        // Predicated region
        $region45: #{tpu_custom_call.1} parent=31 // pred_check
          %p316 = pneg %p315
        $region46: #{tpu_custom_call.1} parent=31 // pred_check_branch
          %318 = sbr.rel (%p316) target = $region48
        $region47: #{tpu_custom_call.1} parent=31 // pred_region
          %v319 = vld [vmem:[%s260] sm:$0xff]
          %v320 = vmul.f32 %v319, 0.17677669
          %v321 = vpack.c.bf16 %v320, %v320
          %vm322 = vcmask 257024
          %323 = vst.msk [vmem:[#allocation2] sm:$0xf] %vm322, %v321
          %vm324 = vcmask 7168
          %325 = vst.msk [vmem:[#allocation3] sm:$0xff] %vm324, -inf
          %326 = vst.msk [vmem:[#allocation4] sm:$0xff] %vm324, 0.0
          %vm327 = vcmask 261120
          %328 = vst.msk [vmem:[#allocation5] sm:$0xff] %vm327, 0.0
        $region48: #{tpu_custom_call.1} parent=31 // pred_fallthru
          _
        %v329 = vld [vmem:[#allocation2] sm:$0xf]
        %v330 = vld [vmem:[%s270] sm:$0xff]
        %v331 = vpack.c.bf16 %v330, %v330
        %v332 = vld [vmem:[%s280] sm:$0xff]
        %v333 = vpack.c.bf16 %v332, %v332
        %vm334 = vcmask 261120
        %v336 = vsel %vm334, %v329, 0
        %v339 = vsel %vm334, %v331, 0
        %341 = vmatpush.bf16.xpose.msra.mxu0 0
        %342 = vmatpush.bf16.xpose.msra.mxu0 0
        %343 = vmatpush.bf16.xpose.msra.mxu0 0
        %344 = vmatpush.bf16.xpose.msra.mxu0 0
        %345 = vmatpush.bf16.xpose.msra.mxu0 0
        %346 = vmatpush.bf16.xpose.msra.mxu0 0
        %347 = vmatpush.bf16.xpose.msra.mxu0 0
        %348 = vmatpush.bf16.xpose.msra.mxu0 %v339
        %349 = vmatmul.bf16.gmra.mxu0 %v336
        %v350 = vpop.f32.mrf.mxu0
        %v351 = vadd.f32 0.0, %v350
        %v352 = vpop.f32.mrf.mxu0
        %353 = vdwg.mxu0
        %v354 = vld [vmem:[#allocation3] sm:$0xff]
        %vm355 = vcmask 64512
        %v356 = vsel %vm355, %v351, -inf
        %357 = vmax.xlane.f32.xlu0 %v356
        %v358 = vpop.xlane.xlu0 %357
        %v359 = vmax.f32 %v354, %v358
        %v360 = vsub.f32 %v354, %v359
        %v361 = vmul.f32 %v360, 1.442695
        %v362 = vpow.pop %v361
        %364 = vset.pattern.permute.xlu0 0
        %365 = vperm.xlu0 %364, %v359
        %v366 = vpop.permute.xlu0 %365
        %v368 = vsub.f32 %v351, %v366
        %v369 = vmul.f32 %v368, 1.442695
        %v370 = vpow.pop %v369
        %v371 = vld [vmem:[#allocation4] sm:$0xff]
        %v372 = vmul.f32 %v362, %v371
        %v373 = vsel %vm355, %v370, 0.0
        %374 = vadd.xlane.f32.xlu0 %v373
        %v375 = vpop.xlane.xlu0 %374
        %v376 = vadd.f32 %v372, %v375
        %vm377 = vcmask 7168
        %378 = vst.msk [vmem:[#allocation4] sm:$0xff] %vm377, %v376
        %v379 = vld [vmem:[#allocation5] sm:$0xff]
        %381 = vset.pattern.permute.xlu0 0
        %382 = vperm.xlu0 %381, %v362
        %v383 = vpop.permute.xlu0 %382
        %v385 = vmul.f32 %v383, %v379
        %v386 = vpack.c.bf16 %v370, %v370
        %v388 = vsel %vm355, %v386, 0
        %vm390 = vcmask 1043456
        %v392 = vsel %vm390, %v333, 0
        %394 = vmatpush.bf16.msra.mxu0 0
        %395 = vmatpush.bf16.msra.mxu0 0
        %396 = vmatpush.bf16.msra.mxu0 0
        %397 = vmatpush.bf16.msra.mxu0 0
        %398 = vmatpush.bf16.msra.mxu0 0
        %399 = vmatpush.bf16.msra.mxu0 0
        %400 = vmatpush.bf16.msra.mxu0 0
        %401 = vmatpush.bf16.msra.mxu0 %v392
        %402 = vmatmul.bf16.gmra.mxu0 %v388
        %v403 = vpop.f32.mrf.mxu0
        %v404 = vadd.f32 0.0, %v403
        %v405 = vpop.f32.mrf.mxu0
        %406 = vdwg.mxu0
        %v407 = vadd.f32 %v385, %v404
        %408 = vst.msk [vmem:[#allocation5] sm:$0xff] %vm334, %v407
        %409 = vst.msk [vmem:[#allocation3] sm:$0xff] %vm377, %v359
        // Predicated region
        $region49: #{tpu_custom_call.1} parent=31 // pred_check
          %p410 = pneg %p315
        $region50: #{tpu_custom_call.1} parent=31 // pred_check_branch
          %412 = sbr.rel (%p410) target = $region52
        $region51: #{tpu_custom_call.1} parent=31 // pred_region
          %v413 = vld [vmem:[#allocation4] sm:$0xff]
          %v414 = vrcp.pop %v413
          %v415 = vld [vmem:[#allocation5] sm:$0xff]
          %417 = vset.pattern.permute.xlu0 0
          %418 = vperm.xlu0 %417, %v414
          %v419 = vpop.permute.xlu0 %418
          %v421 = vmul.f32 %v415, %v419
          %422 = vst.msk [vmem:[%s313] sm:$0xff] %vm334, %v421
        $region52: #{tpu_custom_call.1} parent=31 // pred_fallthru
          _
        %s423 = sand.u32 %s151, 1
        %s424 = scalar_lea.sflag [#allocation8], %s423
        %s425 = sand.u32 %s151, 1
        %s426 = smul.addr %s425, 8
        %s427 = scalar_lea.vmem [#allocation12], %s426
        // Predicated region
        $region53: #{tpu_custom_call.1} parent=31 // pred_check
          %p428 = pneg %p161
        $region54: #{tpu_custom_call.1} parent=31 // pred_check_branch
          %430 = sbr.rel (%p428) target = $region56
        $region55: #{tpu_custom_call.1} parent=31 // pred_region
          %432 = vsyncadd %s424, 0
          %s433 = sadd.s32 %s31, %s30
          %s434 = smul.addr %s29, 4
          %s435 = sadd.s32 %s433, %s434
          %s436 = smul.addr %s435, 8
          %s437 = scalar_lea.hbm %s3, %s436
          %s439 = sshll.u32 %s427, 4
          %s440 = int_to_ptr.vmem [resolvable:$true] %s439
          %s441 = sshll.u32 %s437, 4
          %s442 = int_to_ptr.hbm [resolvable:$true] %s441
          %444 = dma.vmem_to_hbm [thread:$0]  %s440, 128, %s442, %s424
        $region56: #{tpu_custom_call.1} parent=31 // pred_fallthru
          _
      $region32: #{tpu_custom_call.1} parent=5 // pred_fallthru
        _
      %p445 = scmp.le.s32.totalorder 2, %s18
      // Predicated region
      $region57: #{tpu_custom_call.1} parent=5 // pred_check
        %p446 = pneg %p445
      $region58: #{tpu_custom_call.1} parent=5 // pred_check_branch
        %448 = sbr.rel (%p446) target = $region60
      $region59: #{tpu_custom_call.1} parent=5 // pred_region
        %s449 = ssub.s32 %s18, 2
        // Predicated region
        $region61: #{tpu_custom_call.1} parent=59 // pred_check
          %p450 = pneg %p167
        $region62: #{tpu_custom_call.1} parent=59 // pred_check_branch
          %452 = sbr.rel (%p450) target = $region64
        $region63: #{tpu_custom_call.1} parent=59 // pred_region
          %s453 = sand.u32 %s152, 1
          %s454 = scalar_lea.sflag [#allocation8], %s453
          %s455 = sand.u32 %s152, 1
          %s456 = smul.addr %s455, 8
          %s457 = scalar_lea.vmem [#allocation12], %s456
          %459 = dma.done %s454, 128
        $region64: #{tpu_custom_call.1} parent=59 // pred_fallthru
          _
      $region60: #{tpu_custom_call.1} parent=5 // pred_fallthru
        _
    $region6: #{tpu_custom_call.1} parent=1 // loop_footer
      %s22 = sadd.s32 1, %s18
    $region7: #{tpu_custom_call.1} parent=1 // loop_footer_branch
      %17 = sbr.rel target = $region3
    $region8: #{tpu_custom_call.1} parent=1 // loop_exit
      _
    %460 = vsyncpa [#allocation7], 1
    %s461 = scalar_lea.sflag [#allocation7], 1
    %462 = vsyncpa %s461, 1
    %463 = vsyncpa [#allocation10], 1
    %s464 = scalar_lea.sflag [#allocation10], 1
    %465 = vsyncpa %s464, 1
    %466 = vsyncpa [#allocation8], 1
    %s467 = scalar_lea.sflag [#allocation8], 1
    %468 = vsyncpa %s467, 1

</llo_original>
